<compile_context>
chip_gen: v6e
topology: v6e:2x2x1
jax: 0.10.0
libtpu: 0.0.40
codegen_flags: <defaults>
</compile_context>

<pallas_src>
import jax
import jax.numpy as jnp
from jax import lax
from jax.experimental import pallas as pl
from jax.experimental.pallas import tpu as pltpu

_SQRT2      = 1.4142135623730951
_PI         = 3.141592653589793
_HALF_PI    = 1.5707963267948966
_TWO_PI     = 6.283185307179586
_INV_TWO_PI = 0.15915494309189535


# ----------------------------- in-kernel helpers -----------------------------

def _gelu(x):
    # exact (erf) GELU, matching torch.nn.GELU() default
    return 0.5 * x * (1.0 + lax.erf(x / _SQRT2))


def _sin_core(r):
    # sin(r) for r in [-pi/2, pi/2]: odd Taylor polynomial (deg 11), |err| < 6e-8.
    r2 = r * r
    p = -2.5052108385441720e-08
    p = p * r2 + 2.7557319223985893e-06
    p = p * r2 - 1.9841269841269841e-04
    p = p * r2 + 8.3333333333333332e-03
    p = p * r2 - 1.6666666666666666e-01
    p = p * r2 + 1.0
    return r * p


def _sincos(x):
    # One shared range reduction for both sin(x) and cos(x).
    n = jnp.floor(x * _INV_TWO_PI + 0.5)
    r = x - _TWO_PI * n                          # r in [-pi, pi]
    # sin: fold to [-pi/2, pi/2]
    rs = jnp.where(r > _HALF_PI, _PI - r, r)
    rs = jnp.where(rs < -_HALF_PI, -_PI - rs, rs)
    # cos(r) = sin(pi/2 - |r|),  pi/2 - |r| in [-pi/2, pi/2]
    rc = _HALF_PI - jnp.abs(r)
    return _sin_core(rs), _sin_core(rc)


def _mlp(x, w1, b1, w2, b2):
    # two 1x1 convs with GELU in between, as (Cout, Cin) @ (Cin, TN) matmuls:
    # the lane axis (TN, multiple of 128) is the matmul N -> lane-dense output.
    h = jnp.dot(w1, x, preferred_element_type=jnp.float32) + b1
    h = _gelu(h)
    return jnp.dot(w2, h, preferred_element_type=jnp.float32) + b2


# --------------------------------- kernel ------------------------------------

def freblock_kernel(mag_ref, pha_ref,
                    w1m_ref, b1m_ref, w2m_ref, b2m_ref,
                    w1p_ref, b1p_ref, w2p_ref, b2p_ref,
                    re_ref, im_ref):
    mag = mag_ref[0]      # (C, TN): channels on sublanes, freq pixels on lanes
    pha = pha_ref[0]

    mag_o = _mlp(mag, w1m_ref[...], b1m_ref[...], w2m_ref[...], b2m_ref[...])
    pha_o = _mlp(pha, w1p_ref[...], b1p_ref[...], w2p_ref[...], b2p_ref[...])

    s, c = _sincos(pha_o)
    # real/imag recombination of the processed spectrum (lane-dense stores)
    re_ref[0] = mag_o * c
    im_ref[0] = mag_o * s


# --------------------------------- wrapper -----------------------------------

def _pick_tile(n_pix, C):
    # Smallest lane-aligned cover of the pixel axis.
    l0 = pl.cdiv(n_pix, 128) * 128
    # Double-buffered working set: 4 streams (mag, pha, re, im) x 2 buffers
    # x C x TN x 4 bytes = 32*C*TN bytes.  Keep it <= 8 MiB (safe under the
    # default scoped-VMEM limit on v5e/v6e/v7x), and cap at 4096 lanes.
    budget = 8 * 1024 * 1024
    tn_cap = max(128, min(4096, (budget // (32 * C)) // 128 * 128))
    tn = min(l0, tn_cap)
    L = pl.cdiv(n_pix, tn) * tn
    return tn, L


def freqfeature_pallas(x_nchw, p):
    B, C, H, W = x_nchw.shape
    assert C % 2 == 0
    Ch = C // 2

    # rfft2 (norm='backward'); abs/angle at the complex boundary (see TODO above)
    xf = jnp.fft.rfft2(x_nchw, norm='backward')          # (B, C, H, Wf) complex64
    Wf = xf.shape[-1]
    n_pix = H * Wf

    TN, L = _pick_tile(n_pix, C)

    mag = jnp.abs(xf).reshape(B, C, n_pix)
    pha = jnp.angle(xf).reshape(B, C, n_pix)
    if L != n_pix:
        pad = ((0, 0), (0, 0), (0, L - n_pix))
        mag = jnp.pad(mag, pad)
        pha = jnp.pad(pha, pad)

    # weights repacked once: (Cout, Cin, 1, 1) -> (Cout, Cin), biases -> (Cout, 1)
    kp = [
        p['w1m'].reshape(Ch, C), p['b1m'].reshape(Ch, 1),
        p['w2m'].reshape(C, Ch), p['b2m'].reshape(C, 1),
        p['w1p'].reshape(Ch, C), p['b1p'].reshape(Ch, 1),
        p['w2p'].reshape(C, Ch), p['b2p'].reshape(C, 1),
    ]

    act_spec = pl.BlockSpec((1, C, TN), lambda b, t: (b, 0, t))
    w_specs = [pl.BlockSpec(a.shape, lambda b, t: (0, 0)) for a in kp]

    re, im = pl.pallas_call(
        freblock_kernel,
        out_shape=(jax.ShapeDtypeStruct((B, C, L), jnp.float32),
                   jax.ShapeDtypeStruct((B, C, L), jnp.float32)),
        grid=(B, L // TN),
        in_specs=[act_spec, act_spec] + w_specs,
        out_specs=[act_spec, act_spec],
        compiler_params=pltpu.CompilerParams(
            dimension_semantics=("parallel", "parallel")),
    )(mag, pha, *kp)

    re = re[:, :, :n_pix].reshape(B, C, H, Wf)
    im = im[:, :, :n_pix].reshape(B, C, H, Wf)
    x_freq = lax.complex(re, im)
    return jnp.fft.irfft2(x_freq, norm='backward')        # (B, C, H, W) f32


# -------------------------- pure-JAX reference (NCHW) ------------------------

def freqfeature_reference(x, p):
    xf = jnp.fft.rfft2(x, norm='backward')
    mag = jnp.abs(xf)
    pha = jnp.angle(xf)

    def conv1x1(t, w, b):
        return jnp.einsum('oi,bihw->bohw', w[:, :, 0, 0], t,
                          precision=lax.Precision.HIGHEST) + b[None, :, None, None]

    def gelu(z):
        return 0.5 * z * (1.0 + lax.erf(z / _SQRT2))

    mag = conv1x1(gelu(conv1x1(mag, p['w1m'], p['b1m'])), p['w2m'], p['b2m'])
    pha = conv1x1(gelu(conv1x1(pha, p['w1p'], p['b1p'])), p['w2p'], p['b2p'])
    x_freq = lax.complex(mag * jnp.cos(pha), mag * jnp.sin(pha))
    return jnp.fft.irfft2(x_freq, norm='backward')


# ------------------------------- params / main --------------------------------

def init_params(key, dim):
    hid = dim // 2
    ks = jax.random.split(key, 8)

    def u(k, shape, fan_in):
        b = 1.0 / (fan_in ** 0.5)
        return jax.random.uniform(k, shape, jnp.float32, -b, b)

    return {
        'w1m': u(ks[0], (hid, dim, 1, 1), dim), 'b1m': u(ks[1], (hid,), dim),
        'w2m': u(ks[2], (dim, hid, 1, 1), hid), 'b2m': u(ks[3], (dim,), hid),
        'w1p': u(ks[4], (hid, dim, 1, 1), dim), 'b1p': u(ks[5], (hid,), dim),
        'w2p': u(ks[6], (dim, hid, 1, 1), hid), 'b2p': u(ks[7], (dim,), hid),
    }


if __name__ == "__main__":
    key = jax.random.PRNGKey(0)
    B, C, H, W = 2, 4, 16, 16
    kx, kparam = jax.random.split(key)
    x = jax.random.normal(kx, (B, C, H, W), jnp.float32)
    params = init_params(kparam, C)

    out = freqfeature_pallas(x, params)
    out = jax.block_until_ready(out)

    ref = freqfeature_reference(x, params)
    assert out.shape == x.shape and out.dtype == x.dtype
    scale = float(jnp.max(jnp.abs(ref)))
    err = float(jnp.max(jnp.abs(out - ref)))
    if not bool(jnp.isfinite(out).all()) or err > 2e-2 * max(scale, 1.0):
        raise AssertionError(
            f"Pallas kernel mismatch vs reference: max abs err = {err}, scale = {scale}")

    print("KERNEL_OK")
</pallas_src>

<mosaic_0001>
module attributes {stable_mosaic.version = 11 : i64} {
  func.func @freblock_kernel(%arg0: i32, %arg1: i32, %arg2: memref<1x4x256xf32, #tpu.memory_space<vmem>>, %arg3: memref<1x4x256xf32, #tpu.memory_space<vmem>>, %arg4: memref<2x4xf32, #tpu.memory_space<vmem>>, %arg5: memref<2x1xf32, #tpu.memory_space<vmem>>, %arg6: memref<4x2xf32, #tpu.memory_space<vmem>>, %arg7: memref<4x1xf32, #tpu.memory_space<vmem>>, %arg8: memref<2x4xf32, #tpu.memory_space<vmem>>, %arg9: memref<2x1xf32, #tpu.memory_space<vmem>>, %arg10: memref<4x2xf32, #tpu.memory_space<vmem>>, %arg11: memref<4x1xf32, #tpu.memory_space<vmem>>, %arg12: memref<1x4x256xf32, #tpu.memory_space<vmem>>, %arg13: memref<1x4x256xf32, #tpu.memory_space<vmem>>) attributes {dimension_semantics = [#tpu.dimension_semantics<parallel>, #tpu.dimension_semantics<parallel>], iteration_bounds = array<i64: 2, 1>, scalar_prefetch = 0 : i64, scratch_operands = 0 : i64, tpu.core_type = #tpu.core_type<tc>, window_params = [{transform_indices = @transform_0, window_bounds = array<i64: 1, 4, 256>}, {transform_indices = @transform_1, window_bounds = array<i64: 1, 4, 256>}, {pipeline_mode = #tpu.pipeline_mode<synchronous>, transform_indices = @transform_2, window_bounds = array<i64: 2, 4>}, {pipeline_mode = #tpu.pipeline_mode<synchronous>, transform_indices = @transform_3, window_bounds = array<i64: 2, 1>}, {pipeline_mode = #tpu.pipeline_mode<synchronous>, transform_indices = @transform_4, window_bounds = array<i64: 4, 2>}, {pipeline_mode = #tpu.pipeline_mode<synchronous>, transform_indices = @transform_5, window_bounds = array<i64: 4, 1>}, {pipeline_mode = #tpu.pipeline_mode<synchronous>, transform_indices = @transform_6, window_bounds = array<i64: 2, 4>}, {pipeline_mode = #tpu.pipeline_mode<synchronous>, transform_indices = @transform_7, window_bounds = array<i64: 2, 1>}, {pipeline_mode = #tpu.pipeline_mode<synchronous>, transform_indices = @transform_8, window_bounds = array<i64: 4, 2>}, {pipeline_mode = #tpu.pipeline_mode<synchronous>, transform_indices = @transform_9, window_bounds = array<i64: 4, 1>}, {transform_indices = @transform_10, window_bounds = array<i64: 1, 4, 256>}, {transform_indices = @transform_11, window_bounds = array<i64: 1, 4, 256>}]} {
    %c0 = arith.constant 0 : index
    %c0_0 = arith.constant 0 : index
    %c0_1 = arith.constant 0 : index
    %0 = vector.load %arg2[%c0, %c0_0, %c0_1] : memref<1x4x256xf32, #tpu.memory_space<vmem>>, vector<1x4x256xf32>
    %1 = vector.shape_cast %0 : vector<1x4x256xf32> to vector<4x256xf32>
    %c0_2 = arith.constant 0 : index
    %c0_3 = arith.constant 0 : index
    %c0_4 = arith.constant 0 : index
    %2 = vector.load %arg3[%c0_2, %c0_3, %c0_4] : memref<1x4x256xf32, #tpu.memory_space<vmem>>, vector<1x4x256xf32>
    %3 = vector.shape_cast %2 : vector<1x4x256xf32> to vector<4x256xf32>
    %c0_5 = arith.constant 0 : index
    %c0_6 = arith.constant 0 : index
    %4 = vector.load %arg4[%c0_5, %c0_6] : memref<2x4xf32, #tpu.memory_space<vmem>>, vector<2x4xf32>
    %c0_7 = arith.constant 0 : index
    %c0_8 = arith.constant 0 : index
    %5 = vector.load %arg5[%c0_7, %c0_8] : memref<2x1xf32, #tpu.memory_space<vmem>>, vector<2x1xf32>
    %c0_9 = arith.constant 0 : index
    %c0_10 = arith.constant 0 : index
    %6 = vector.load %arg6[%c0_9, %c0_10] : memref<4x2xf32, #tpu.memory_space<vmem>>, vector<4x2xf32>
    %c0_11 = arith.constant 0 : index
    %c0_12 = arith.constant 0 : index
    %7 = vector.load %arg7[%c0_11, %c0_12] : memref<4x1xf32, #tpu.memory_space<vmem>>, vector<4x1xf32>
    %cst = arith.constant dense<0.000000e+00> : vector<2x256xf32>
    %8 = tpu.matmul %4, %1, %cst {dimension_numbers = #tpu.dot_dimension_numbers<[1], [0], [0], [1], [0, 0, 1, 1], [], []>} : vector<2x4xf32>, vector<4x256xf32>, vector<2x256xf32> -> vector<2x256xf32>
    %9 = vector.broadcast %5 : vector<2x1xf32> to vector<2x256xf32>
    %10 = arith.addf %8, %9 : vector<2x256xf32>
    %cst_13 = arith.constant 5.000000e-01 : f32
    %11 = vector.broadcast %cst_13 : f32 to vector<2x256xf32>
    %12 = arith.mulf %11, %10 : vector<2x256xf32>
    %cst_14 = arith.constant 1.41421354 : f32
    %13 = vector.broadcast %cst_14 : f32 to vector<2x256xf32>
    %14 = arith.divf %10, %13 : vector<2x256xf32>
    %15 = math.erf %14 : vector<2x256xf32>
    %cst_15 = arith.constant 1.000000e+00 : f32
    %16 = vector.broadcast %cst_15 : f32 to vector<2x256xf32>
    %17 = arith.addf %16, %15 : vector<2x256xf32>
    %18 = arith.mulf %12, %17 : vector<2x256xf32>
    %cst_16 = arith.constant dense<0.000000e+00> : vector<4x256xf32>
    %19 = tpu.matmul %6, %18, %cst_16 {dimension_numbers = #tpu.dot_dimension_numbers<[1], [0], [0], [1], [0, 0, 1, 1], [], []>} : vector<4x2xf32>, vector<2x256xf32>, vector<4x256xf32> -> vector<4x256xf32>
    %20 = vector.broadcast %7 : vector<4x1xf32> to vector<4x256xf32>
    %21 = arith.addf %19, %20 : vector<4x256xf32>
    %c0_17 = arith.constant 0 : index
    %c0_18 = arith.constant 0 : index
    %22 = vector.load %arg8[%c0_17, %c0_18] : memref<2x4xf32, #tpu.memory_space<vmem>>, vector<2x4xf32>
    %c0_19 = arith.constant 0 : index
    %c0_20 = arith.constant 0 : index
    %23 = vector.load %arg9[%c0_19, %c0_20] : memref<2x1xf32, #tpu.memory_space<vmem>>, vector<2x1xf32>
    %c0_21 = arith.constant 0 : index
    %c0_22 = arith.constant 0 : index
    %24 = vector.load %arg10[%c0_21, %c0_22] : memref<4x2xf32, #tpu.memory_space<vmem>>, vector<4x2xf32>
    %c0_23 = arith.constant 0 : index
    %c0_24 = arith.constant 0 : index
    %25 = vector.load %arg11[%c0_23, %c0_24] : memref<4x1xf32, #tpu.memory_space<vmem>>, vector<4x1xf32>
    %cst_25 = arith.constant dense<0.000000e+00> : vector<2x256xf32>
    %26 = tpu.matmul %22, %3, %cst_25 {dimension_numbers = #tpu.dot_dimension_numbers<[1], [0], [0], [1], [0, 0, 1, 1], [], []>} : vector<2x4xf32>, vector<4x256xf32>, vector<2x256xf32> -> vector<2x256xf32>
    %27 = vector.broadcast %23 : vector<2x1xf32> to vector<2x256xf32>
    %28 = arith.addf %26, %27 : vector<2x256xf32>
    %cst_26 = arith.constant 5.000000e-01 : f32
    %29 = vector.broadcast %cst_26 : f32 to vector<2x256xf32>
    %30 = arith.mulf %29, %28 : vector<2x256xf32>
    %cst_27 = arith.constant 1.41421354 : f32
    %31 = vector.broadcast %cst_27 : f32 to vector<2x256xf32>
    %32 = arith.divf %28, %31 : vector<2x256xf32>
    %33 = math.erf %32 : vector<2x256xf32>
    %cst_28 = arith.constant 1.000000e+00 : f32
    %34 = vector.broadcast %cst_28 : f32 to vector<2x256xf32>
    %35 = arith.addf %34, %33 : vector<2x256xf32>
    %36 = arith.mulf %30, %35 : vector<2x256xf32>
    %cst_29 = arith.constant dense<0.000000e+00> : vector<4x256xf32>
    %37 = tpu.matmul %24, %36, %cst_29 {dimension_numbers = #tpu.dot_dimension_numbers<[1], [0], [0], [1], [0, 0, 1, 1], [], []>} : vector<4x2xf32>, vector<2x256xf32>, vector<4x256xf32> -> vector<4x256xf32>
    %38 = vector.broadcast %25 : vector<4x1xf32> to vector<4x256xf32>
    %39 = arith.addf %37, %38 : vector<4x256xf32>
    %cst_30 = arith.constant 0.159154937 : f32
    %40 = vector.broadcast %cst_30 : f32 to vector<4x256xf32>
    %41 = arith.mulf %39, %40 : vector<4x256xf32>
    %cst_31 = arith.constant 5.000000e-01 : f32
    %42 = vector.broadcast %cst_31 : f32 to vector<4x256xf32>
    %43 = arith.addf %41, %42 : vector<4x256xf32>
    %44 = math.floor %43 : vector<4x256xf32>
    %cst_32 = arith.constant 6.28318548 : f32
    %45 = vector.broadcast %cst_32 : f32 to vector<4x256xf32>
    %46 = arith.mulf %45, %44 : vector<4x256xf32>
    %47 = arith.subf %39, %46 : vector<4x256xf32>
    %cst_33 = arith.constant 1.57079637 : f32
    %48 = vector.broadcast %cst_33 : f32 to vector<4x256xf32>
    %49 = arith.cmpf ogt, %47, %48 : vector<4x256xf32>
    %cst_34 = arith.constant 3.14159274 : f32
    %50 = vector.broadcast %cst_34 : f32 to vector<4x256xf32>
    %51 = arith.subf %50, %47 : vector<4x256xf32>
    %52 = arith.select %49, %51, %47 : vector<4x256xi1>, vector<4x256xf32>
    %cst_35 = arith.constant -1.57079637 : f32
    %53 = vector.broadcast %cst_35 : f32 to vector<4x256xf32>
    %54 = arith.cmpf olt, %52, %53 : vector<4x256xf32>
    %cst_36 = arith.constant -3.14159274 : f32
    %55 = vector.broadcast %cst_36 : f32 to vector<4x256xf32>
    %56 = arith.subf %55, %52 : vector<4x256xf32>
    %57 = arith.select %54, %56, %52 : vector<4x256xi1>, vector<4x256xf32>
    %58 = math.absf %47 : vector<4x256xf32>
    %cst_37 = arith.constant 1.57079637 : f32
    %59 = vector.broadcast %cst_37 : f32 to vector<4x256xf32>
    %60 = arith.subf %59, %58 : vector<4x256xf32>
    %61 = arith.mulf %57, %57 : vector<4x256xf32>
    %cst_38 = arith.constant -2.50521079E-8 : f32
    %62 = vector.broadcast %cst_38 : f32 to vector<4x256xf32>
    %63 = arith.mulf %62, %61 : vector<4x256xf32>
    %cst_39 = arith.constant 2.75573188E-6 : f32
    %64 = vector.broadcast %cst_39 : f32 to vector<4x256xf32>
    %65 = arith.addf %63, %64 : vector<4x256xf32>
    %66 = arith.mulf %65, %61 : vector<4x256xf32>
    %cst_40 = arith.constant 1.98412701E-4 : f32
    %67 = vector.broadcast %cst_40 : f32 to vector<4x256xf32>
    %68 = arith.subf %66, %67 : vector<4x256xf32>
    %69 = arith.mulf %68, %61 : vector<4x256xf32>
    %cst_41 = arith.constant 0.00833333377 : f32
    %70 = vector.broadcast %cst_41 : f32 to vector<4x256xf32>
    %71 = arith.addf %69, %70 : vector<4x256xf32>
    %72 = arith.mulf %71, %61 : vector<4x256xf32>
    %cst_42 = arith.constant 0.166666672 : f32
    %73 = vector.broadcast %cst_42 : f32 to vector<4x256xf32>
    %74 = arith.subf %72, %73 : vector<4x256xf32>
    %75 = arith.mulf %74, %61 : vector<4x256xf32>
    %cst_43 = arith.constant 1.000000e+00 : f32
    %76 = vector.broadcast %cst_43 : f32 to vector<4x256xf32>
    %77 = arith.addf %75, %76 : vector<4x256xf32>
    %78 = arith.mulf %57, %77 : vector<4x256xf32>
    %79 = arith.mulf %60, %60 : vector<4x256xf32>
    %cst_44 = arith.constant -2.50521079E-8 : f32
    %80 = vector.broadcast %cst_44 : f32 to vector<4x256xf32>
    %81 = arith.mulf %80, %79 : vector<4x256xf32>
    %cst_45 = arith.constant 2.75573188E-6 : f32
    %82 = vector.broadcast %cst_45 : f32 to vector<4x256xf32>
    %83 = arith.addf %81, %82 : vector<4x256xf32>
    %84 = arith.mulf %83, %79 : vector<4x256xf32>
    %cst_46 = arith.constant 1.98412701E-4 : f32
    %85 = vector.broadcast %cst_46 : f32 to vector<4x256xf32>
    %86 = arith.subf %84, %85 : vector<4x256xf32>
    %87 = arith.mulf %86, %79 : vector<4x256xf32>
    %cst_47 = arith.constant 0.00833333377 : f32
    %88 = vector.broadcast %cst_47 : f32 to vector<4x256xf32>
    %89 = arith.addf %87, %88 : vector<4x256xf32>
    %90 = arith.mulf %89, %79 : vector<4x256xf32>
    %cst_48 = arith.constant 0.166666672 : f32
    %91 = vector.broadcast %cst_48 : f32 to vector<4x256xf32>
    %92 = arith.subf %90, %91 : vector<4x256xf32>
    %93 = arith.mulf %92, %79 : vector<4x256xf32>
    %cst_49 = arith.constant 1.000000e+00 : f32
    %94 = vector.broadcast %cst_49 : f32 to vector<4x256xf32>
    %95 = arith.addf %93, %94 : vector<4x256xf32>
    %96 = arith.mulf %60, %95 : vector<4x256xf32>
    %97 = arith.mulf %21, %96 : vector<4x256xf32>
    %c0_50 = arith.constant 0 : index
    %c0_51 = arith.constant 0 : index
    %c0_52 = arith.constant 0 : index
    %98 = vector.load %arg12[%c0_50, %c0_51, %c0_52] : memref<1x4x256xf32, #tpu.memory_space<vmem>>, vector<1x4x256xf32>
    %99 = vector.shape_cast %98 : vector<1x4x256xf32> to vector<4x256xf32>
    %100 = vector.shape_cast %97 : vector<4x256xf32> to vector<1x4x256xf32>
    tpu.vector_store %arg12[%c0_50, %c0_51, %c0_52], %100 {strides = array<i32>} : memref<1x4x256xf32, #tpu.memory_space<vmem>>, vector<1x4x256xf32>,
    %101 = arith.mulf %21, %78 : vector<4x256xf32>
    %c0_53 = arith.constant 0 : index
    %c0_54 = arith.constant 0 : index
    %c0_55 = arith.constant 0 : index
    %102 = vector.load %arg13[%c0_53, %c0_54, %c0_55] : memref<1x4x256xf32, #tpu.memory_space<vmem>>, vector<1x4x256xf32>
    %103 = vector.shape_cast %102 : vector<1x4x256xf32> to vector<4x256xf32>
    %104 = vector.shape_cast %101 : vector<4x256xf32> to vector<1x4x256xf32>
    tpu.vector_store %arg13[%c0_53, %c0_54, %c0_55], %104 {strides = array<i32>} : memref<1x4x256xf32, #tpu.memory_space<vmem>>, vector<1x4x256xf32>,
    return
  }
  func.func @transform_0(%arg0: i32, %arg1: i32) -> (i32, i32, i32) {
    %c0_i32 = arith.constant 0 : i32
    %c0_i32_0 = arith.constant 0 : i32
    return %arg0, %c0_i32, %arg1 : i32, i32, i32
  }
  func.func @transform_1(%arg0: i32, %arg1: i32) -> (i32, i32, i32) {
    %c0_i32 = arith.constant 0 : i32
    %c0_i32_0 = arith.constant 0 : i32
    return %arg0, %c0_i32, %arg1 : i32, i32, i32
  }
  func.func @transform_2(%arg0: i32, %arg1: i32) -> (i32, i32) {
    %c0_i32 = arith.constant 0 : i32
    %c0_i32_0 = arith.constant 0 : i32
    %c0_i32_1 = arith.constant 0 : i32
    return %c0_i32, %c0_i32_0 : i32, i32
  }
  func.func @transform_3(%arg0: i32, %arg1: i32) -> (i32, i32) {
    %c0_i32 = arith.constant 0 : i32
    %c0_i32_0 = arith.constant 0 : i32
    %c0_i32_1 = arith.constant 0 : i32
    return %c0_i32, %c0_i32_0 : i32, i32
  }
  func.func @transform_4(%arg0: i32, %arg1: i32) -> (i32, i32) {
    %c0_i32 = arith.constant 0 : i32
    %c0_i32_0 = arith.constant 0 : i32
    %c0_i32_1 = arith.constant 0 : i32
    return %c0_i32, %c0_i32_0 : i32, i32
  }
  func.func @transform_5(%arg0: i32, %arg1: i32) -> (i32, i32) {
    %c0_i32 = arith.constant 0 : i32
    %c0_i32_0 = arith.constant 0 : i32
    %c0_i32_1 = arith.constant 0 : i32
    return %c0_i32, %c0_i32_0 : i32, i32
  }
  func.func @transform_6(%arg0: i32, %arg1: i32) -> (i32, i32) {
    %c0_i32 = arith.constant 0 : i32
    %c0_i32_0 = arith.constant 0 : i32
    %c0_i32_1 = arith.constant 0 : i32
    return %c0_i32, %c0_i32_0 : i32, i32
  }
  func.func @transform_7(%arg0: i32, %arg1: i32) -> (i32, i32) {
    %c0_i32 = arith.constant 0 : i32
    %c0_i32_0 = arith.constant 0 : i32
    %c0_i32_1 = arith.constant 0 : i32
    return %c0_i32, %c0_i32_0 : i32, i32
  }
  func.func @transform_8(%arg0: i32, %arg1: i32) -> (i32, i32) {
    %c0_i32 = arith.constant 0 : i32
    %c0_i32_0 = arith.constant 0 : i32
    %c0_i32_1 = arith.constant 0 : i32
    return %c0_i32, %c0_i32_0 : i32, i32
  }
  func.func @transform_9(%arg0: i32, %arg1: i32) -> (i32, i32) {
    %c0_i32 = arith.constant 0 : i32
    %c0_i32_0 = arith.constant 0 : i32
    %c0_i32_1 = arith.constant 0 : i32
    return %c0_i32, %c0_i32_0 : i32, i32
  }
  func.func @transform_10(%arg0: i32, %arg1: i32) -> (i32, i32, i32) {
    %c0_i32 = arith.constant 0 : i32
    %c0_i32_0 = arith.constant 0 : i32
    return %arg0, %c0_i32, %arg1 : i32, i32, i32
  }
  func.func @transform_11(%arg0: i32, %arg1: i32) -> (i32, i32, i32) {
    %c0_i32 = arith.constant 0 : i32
    %c0_i32_0 = arith.constant 0 : i32
    return %arg0, %c0_i32, %arg1 : i32, i32, i32
  }
}

</mosaic_0001>

<llo_original>
// kernel: tpu_custom_call.1
$region0: #{tpu_custom_call.1}
  #allocation0 [shape = 'u32[]', space=smem, size = 0x4, offset = 0x4, fixed_abs, tag = 'smem constant byte address 0x4 - core index']
  #allocation1 [shape = 'u32[144,128]{1,0:T(1,128)}', space=vmem, size = 0x12000, scoped, tag = 'internal scratch']
  %s0 = inlined_call_operand.vmem [shape: f32[2,4,256], index: 0, kind: input, shape index: {}]
  %s1 = inlined_call_operand.hbm [shape: f32[2,4,256], index: 1, kind: input, shape index: {}]
  %s2 = inlined_call_operand.vmem [shape: f32[2,4], index: 2, kind: input, shape index: {}]
  %s3 = inlined_call_operand.vmem [shape: f32[2,1], index: 3, kind: input, shape index: {}]
  %s4 = inlined_call_operand.vmem [shape: f32[4,2], index: 4, kind: input, shape index: {}]
  %s5 = inlined_call_operand.vmem [shape: f32[4,1], index: 5, kind: input, shape index: {}]
  %s6 = inlined_call_operand.vmem [shape: f32[2,4], index: 6, kind: input, shape index: {}]
  %s7 = inlined_call_operand.vmem [shape: f32[2,1], index: 7, kind: input, shape index: {}]
  %s8 = inlined_call_operand.vmem [shape: f32[4,2], index: 8, kind: input, shape index: {}]
  %s9 = inlined_call_operand.vmem [shape: f32[4,1], index: 9, kind: input, shape index: {}]
  %s10 = inlined_call_operand.hbm [shape: f32[2,4,256], index: 10, kind: output, shape index: {0}]
  %s11 = inlined_call_operand.hbm [shape: f32[2,4,256], index: 11, kind: output, shape index: {1}]
  %12 = xla_tuple %s10, %s11
  %s13 = sld [smem:[#allocation0]]
  $region85: #{tpu_custom_call.1} parent=0
    _
  %s15 = ssub.s32 1, %s13
  %s16 = scalar_select 0, %s15, %s13
  $region1: #{tpu_custom_call.1} parent=0
    #allocation2 [shape = 'u8[8192]{0}', space=vmem, size = 0x2000, scoped, tag = 'input window, operand 1']
    #allocation3 [shape = 's32[2]{0}', space=sflag, size = 0x8, scoped, tag = 'scoped memory for tpu_custom_call.1']
    #allocation4 [shape = 's32[2]{0}', space=sflag, size = 0x8, scoped, tag = 'scoped memory for tpu_custom_call.1']
    #allocation5 [shape = 'u8[8192]{0}', space=vmem, size = 0x2000, scoped, tag = 'output window, operand 0']
    #allocation6 [shape = 'u8[8192]{0}', space=vmem, size = 0x2000, scoped, tag = 'output window, operand 1']
    #allocation7 [shape = 's32[2]{0}', space=sflag, size = 0x8, scoped, tag = 'scoped memory for tpu_custom_call.1']
    %17 = vsyncpa [#allocation3], 0
    %s18 = scalar_lea.sflag [#allocation3], 1
    %19 = vsyncpa %s18, 0
    %20 = vsyncpa [#allocation4], 0
    %s21 = scalar_lea.sflag [#allocation4], 1
    %22 = vsyncpa %s21, 0
    %23 = vsyncpa [#allocation7], 0
    %s24 = scalar_lea.sflag [#allocation7], 1
    %25 = vsyncpa %s24, 0
    loop: start=0, step=1, limit=4
    $region2: #{tpu_custom_call.1} parent=1 // loop_pre_header
      _
    $region3: #{tpu_custom_call.1} parent=1 // loop_header
      %s27 = sphi 0, %s31
      %p28 = scmp.ge.s32.totalorder %s27, 4
      %s34 = sphi 0, %s46
      %s35 = sphi 0, %s42
      %s36 = sphi 0, %s34
      %s37 = sphi 0, %s35
      %s38 = sphi 0, %s36
      %s39 = sphi 0, %s37
      %s51 = sphi 0, %s53
      %s54 = sphi 0, %s51
      %s55 = sphi 0, %s54
      %s71 = sphi 0, %s55
      %s79 = sphi 0, %s81
      %s82 = sphi 0, %s79
      %s83 = sphi 0, %s82
      %s99 = sphi 0, %s83
      %s103 = sphi 0, %s103
      %s105 = sphi 0, %s103
      %s106 = sphi 0, %s105
      %s120 = sphi 0, %s106
      %s124 = sphi 0, %s124
      %s126 = sphi 0, %s124
      %s127 = sphi 0, %s126
      %s141 = sphi 0, %s127
      %s145 = sphi 0, %s145
      %s147 = sphi 0, %s145
      %s148 = sphi 0, %s147
      %s162 = sphi 0, %s148
      %s166 = sphi 0, %s166
      %s168 = sphi 0, %s166
      %s169 = sphi 0, %s168
      %s183 = sphi 0, %s169
      %s187 = sphi 0, %s187
      %s189 = sphi 0, %s187
      %s190 = sphi 0, %s189
      %s204 = sphi 0, %s190
      %s208 = sphi 0, %s208
      %s210 = sphi 0, %s208
      %s211 = sphi 0, %s210
      %s225 = sphi 0, %s211
      %s229 = sphi 0, %s229
      %s231 = sphi 0, %s229
      %s232 = sphi 0, %s231
      %s246 = sphi 0, %s232
      %s250 = sphi 0, %s250
      %s252 = sphi 0, %s250
      %s253 = sphi 0, %s252
      %s267 = sphi 0, %s253
      %s275 = sphi 0, %s277
      %s278 = sphi 0, %s275
      %s279 = sphi 0, %s278
      %s295 = sphi 0, %s279
      %s303 = sphi 0, %s305
      %s306 = sphi 0, %s303
      %s307 = sphi 0, %s306
      %s323 = sphi 0, %s307
    $region4: #{tpu_custom_call.1} parent=1 // loop_header_branch
      %30 = sbr.rel (%p28) target = $region8
    $region5: #{tpu_custom_call.1} parent=1 // loop_body
      %s32 = ssub.s32 %s27, 1
      %s33 = ssub.s32 %s27, 2
      %s40 = sadd.s32 1, %s35
      %p41 = scmp.ge.s32.totalorder %s40, 1
      %s42 = scalar_select %p41, 0, %s40
      %s43 = sadd.s32 1, %s34
      %s44 = scalar_select %p41, %s43, %s34
      %p45 = scmp.ge.s32.totalorder %s44, 2
      %s46 = scalar_select %p45, 0, %s44
      %s47 = ssub.s32 %s34, %s46
      %s48 = ssub.s32 %s35, %s42
      %s49 = sor.u32 %s47, %s48
      %p50 = scmp.eq.s32.totalorder %s49, 0
      %s52 = sadd.s32 %s51, 1
      %s53 = scalar_select %p50, %s51, %s52
      %p56 = pneg %p50
      %p57 = scmp.eq.s32.totalorder %s27, 1
      %p58 = por %p56, %p57
      %p59 = scmp.ne.s32.totalorder %s51, %s54
      %p60 = scmp.eq.s32.totalorder %s27, 0
      %p61 = por %p59, %p60
      %p62 = scmp.ne.s32.totalorder %s51, %s54
      %p63 = scmp.eq.s32.totalorder %s32, 1
      %p64 = por %p62, %p63
      %p65 = scmp.ne.s32.totalorder %s54, %s55
      %p66 = scmp.eq.s32.totalorder %s32, 0
      %p67 = por %p65, %p66
      %p68 = scmp.ne.s32.totalorder %s54, %s55
      %p69 = scmp.eq.s32.totalorder %s33, 1
      %p70 = por %p68, %p69
      %p72 = scmp.ne.s32.totalorder %s55, %s71
      %p73 = scmp.eq.s32.totalorder %s33, 0
      %p74 = por %p72, %p73
      %s75 = ssub.s32 %s34, %s46
      %s76 = ssub.s32 %s35, %s42
      %s77 = sor.u32 %s75, %s76
      %p78 = scmp.eq.s32.totalorder %s77, 0
      %s80 = sadd.s32 %s79, 1
      %s81 = scalar_select %p78, %s79, %s80
      %p84 = pneg %p78
      %p85 = scmp.eq.s32.totalorder %s27, 1
      %p86 = por %p84, %p85
      %p87 = scmp.ne.s32.totalorder %s79, %s82
      %p88 = scmp.eq.s32.totalorder %s27, 0
      %p89 = por %p87, %p88
      %p90 = scmp.ne.s32.totalorder %s79, %s82
      %p91 = scmp.eq.s32.totalorder %s32, 1
      %p92 = por %p90, %p91
      %p93 = scmp.ne.s32.totalorder %s82, %s83
      %p94 = scmp.eq.s32.totalorder %s32, 0
      %p95 = por %p93, %p94
      %p96 = scmp.ne.s32.totalorder %s82, %s83
      %p97 = scmp.eq.s32.totalorder %s33, 1
      %p98 = por %p96, %p97
      %p100 = scmp.ne.s32.totalorder %s83, %s99
      %p101 = scmp.eq.s32.totalorder %s33, 0
      %p102 = por %p100, %p101
      %s104 = sadd.s32 %s103, 1
      %p107 = scmp.eq.s32.totalorder %s27, 1
      %p108 = scmp.ne.s32.totalorder %s103, %s105
      %p109 = scmp.eq.s32.totalorder %s27, 0
      %p110 = por %p108, %p109
      %p111 = scmp.ne.s32.totalorder %s103, %s105
      %p112 = scmp.eq.s32.totalorder %s32, 1
      %p113 = por %p111, %p112
      %p114 = scmp.ne.s32.totalorder %s105, %s106
      %p115 = scmp.eq.s32.totalorder %s32, 0
      %p116 = por %p114, %p115
      %p117 = scmp.ne.s32.totalorder %s105, %s106
      %p118 = scmp.eq.s32.totalorder %s33, 1
      %p119 = por %p117, %p118
      %p121 = scmp.ne.s32.totalorder %s106, %s120
      %p122 = scmp.eq.s32.totalorder %s33, 0
      %p123 = por %p121, %p122
      %s125 = sadd.s32 %s124, 1
      %p128 = scmp.eq.s32.totalorder %s27, 1
      %p129 = scmp.ne.s32.totalorder %s124, %s126
      %p130 = scmp.eq.s32.totalorder %s27, 0
      %p131 = por %p129, %p130
      %p132 = scmp.ne.s32.totalorder %s124, %s126
      %p133 = scmp.eq.s32.totalorder %s32, 1
      %p134 = por %p132, %p133
      %p135 = scmp.ne.s32.totalorder %s126, %s127
      %p136 = scmp.eq.s32.totalorder %s32, 0
      %p137 = por %p135, %p136
      %p138 = scmp.ne.s32.totalorder %s126, %s127
      %p139 = scmp.eq.s32.totalorder %s33, 1
      %p140 = por %p138, %p139
      %p142 = scmp.ne.s32.totalorder %s127, %s141
      %p143 = scmp.eq.s32.totalorder %s33, 0
      %p144 = por %p142, %p143
      %s146 = sadd.s32 %s145, 1
      %p149 = scmp.eq.s32.totalorder %s27, 1
      %p150 = scmp.ne.s32.totalorder %s145, %s147
      %p151 = scmp.eq.s32.totalorder %s27, 0
      %p152 = por %p150, %p151
      %p153 = scmp.ne.s32.totalorder %s145, %s147
      %p154 = scmp.eq.s32.totalorder %s32, 1
      %p155 = por %p153, %p154
      %p156 = scmp.ne.s32.totalorder %s147, %s148
      %p157 = scmp.eq.s32.totalorder %s32, 0
      %p158 = por %p156, %p157
      %p159 = scmp.ne.s32.totalorder %s147, %s148
      %p160 = scmp.eq.s32.totalorder %s33, 1
      %p161 = por %p159, %p160
      %p163 = scmp.ne.s32.totalorder %s148, %s162
      %p164 = scmp.eq.s32.totalorder %s33, 0
      %p165 = por %p163, %p164
      %s167 = sadd.s32 %s166, 1
      %p170 = scmp.eq.s32.totalorder %s27, 1
      %p171 = scmp.ne.s32.totalorder %s166, %s168
      %p172 = scmp.eq.s32.totalorder %s27, 0
      %p173 = por %p171, %p172
      %p174 = scmp.ne.s32.totalorder %s166, %s168
      %p175 = scmp.eq.s32.totalorder %s32, 1
      %p176 = por %p174, %p175
      %p177 = scmp.ne.s32.totalorder %s168, %s169
      %p178 = scmp.eq.s32.totalorder %s32, 0
      %p179 = por %p177, %p178
      %p180 = scmp.ne.s32.totalorder %s168, %s169
      %p181 = scmp.eq.s32.totalorder %s33, 1
      %p182 = por %p180, %p181
      %p184 = scmp.ne.s32.totalorder %s169, %s183
      %p185 = scmp.eq.s32.totalorder %s33, 0
      %p186 = por %p184, %p185
      %s188 = sadd.s32 %s187, 1
      %p191 = scmp.eq.s32.totalorder %s27, 1
      %p192 = scmp.ne.s32.totalorder %s187, %s189
      %p193 = scmp.eq.s32.totalorder %s27, 0
      %p194 = por %p192, %p193
      %p195 = scmp.ne.s32.totalorder %s187, %s189
      %p196 = scmp.eq.s32.totalorder %s32, 1
      %p197 = por %p195, %p196
      %p198 = scmp.ne.s32.totalorder %s189, %s190
      %p199 = scmp.eq.s32.totalorder %s32, 0
      %p200 = por %p198, %p199
      %p201 = scmp.ne.s32.totalorder %s189, %s190
      %p202 = scmp.eq.s32.totalorder %s33, 1
      %p203 = por %p201, %p202
      %p205 = scmp.ne.s32.totalorder %s190, %s204
      %p206 = scmp.eq.s32.totalorder %s33, 0
      %p207 = por %p205, %p206
      %s209 = sadd.s32 %s208, 1
      %p212 = scmp.eq.s32.totalorder %s27, 1
      %p213 = scmp.ne.s32.totalorder %s208, %s210
      %p214 = scmp.eq.s32.totalorder %s27, 0
      %p215 = por %p213, %p214
      %p216 = scmp.ne.s32.totalorder %s208, %s210
      %p217 = scmp.eq.s32.totalorder %s32, 1
      %p218 = por %p216, %p217
      %p219 = scmp.ne.s32.totalorder %s210, %s211
      %p220 = scmp.eq.s32.totalorder %s32, 0
      %p221 = por %p219, %p220
      %p222 = scmp.ne.s32.totalorder %s210, %s211
      %p223 = scmp.eq.s32.totalorder %s33, 1
      %p224 = por %p222, %p223
      %p226 = scmp.ne.s32.totalorder %s211, %s225
      %p227 = scmp.eq.s32.totalorder %s33, 0
      %p228 = por %p226, %p227
      %s230 = sadd.s32 %s229, 1
      %p233 = scmp.eq.s32.totalorder %s27, 1
      %p234 = scmp.ne.s32.totalorder %s229, %s231
      %p235 = scmp.eq.s32.totalorder %s27, 0
      %p236 = por %p234, %p235
      %p237 = scmp.ne.s32.totalorder %s229, %s231
      %p238 = scmp.eq.s32.totalorder %s32, 1
      %p239 = por %p237, %p238
      %p240 = scmp.ne.s32.totalorder %s231, %s232
      %p241 = scmp.eq.s32.totalorder %s32, 0
      %p242 = por %p240, %p241
      %p243 = scmp.ne.s32.totalorder %s231, %s232
      %p244 = scmp.eq.s32.totalorder %s33, 1
      %p245 = por %p243, %p244
      %p247 = scmp.ne.s32.totalorder %s232, %s246
      %p248 = scmp.eq.s32.totalorder %s33, 0
      %p249 = por %p247, %p248
      %s251 = sadd.s32 %s250, 1
      %p254 = scmp.eq.s32.totalorder %s27, 1
      %p255 = scmp.ne.s32.totalorder %s250, %s252
      %p256 = scmp.eq.s32.totalorder %s27, 0
      %p257 = por %p255, %p256
      %p258 = scmp.ne.s32.totalorder %s250, %s252
      %p259 = scmp.eq.s32.totalorder %s32, 1
      %p260 = por %p258, %p259
      %p261 = scmp.ne.s32.totalorder %s252, %s253
      %p262 = scmp.eq.s32.totalorder %s32, 0
      %p263 = por %p261, %p262
      %p264 = scmp.ne.s32.totalorder %s252, %s253
      %p265 = scmp.eq.s32.totalorder %s33, 1
      %p266 = por %p264, %p265
      %p268 = scmp.ne.s32.totalorder %s253, %s267
      %p269 = scmp.eq.s32.totalorder %s33, 0
      %p270 = por %p268, %p269
      %s271 = ssub.s32 %s34, %s46
      %s272 = ssub.s32 %s35, %s42
      %s273 = sor.u32 %s271, %s272
      %p274 = scmp.eq.s32.totalorder %s273, 0
      %s276 = sadd.s32 %s275, 1
      %s277 = scalar_select %p274, %s275, %s276
      %p280 = pneg %p274
      %p281 = scmp.eq.s32.totalorder %s27, 1
      %p282 = por %p280, %p281
      %p283 = scmp.ne.s32.totalorder %s275, %s278
      %p284 = scmp.eq.s32.totalorder %s27, 0
      %p285 = por %p283, %p284
      %p286 = scmp.ne.s32.totalorder %s275, %s278
      %p287 = scmp.eq.s32.totalorder %s32, 1
      %p288 = por %p286, %p287
      %p289 = scmp.ne.s32.totalorder %s278, %s279
      %p290 = scmp.eq.s32.totalorder %s32, 0
      %p291 = por %p289, %p290
      %p292 = scmp.ne.s32.totalorder %s278, %s279
      %p293 = scmp.eq.s32.totalorder %s33, 1
      %p294 = por %p292, %p293
      %p296 = scmp.ne.s32.totalorder %s279, %s295
      %p297 = scmp.eq.s32.totalorder %s33, 0
      %p298 = por %p296, %p297
      %s299 = ssub.s32 %s34, %s46
      %s300 = ssub.s32 %s35, %s42
      %s301 = sor.u32 %s299, %s300
      %p302 = scmp.eq.s32.totalorder %s301, 0
      %s304 = sadd.s32 %s303, 1
      %s305 = scalar_select %p302, %s303, %s304
      %p308 = pneg %p302
      %p309 = scmp.eq.s32.totalorder %s27, 1
      %p310 = por %p308, %p309
      %p311 = scmp.ne.s32.totalorder %s303, %s306
      %p312 = scmp.eq.s32.totalorder %s27, 0
      %p313 = por %p311, %p312
      %p314 = scmp.ne.s32.totalorder %s303, %s306
      %p315 = scmp.eq.s32.totalorder %s32, 1
      %p316 = por %p314, %p315
      %p317 = scmp.ne.s32.totalorder %s306, %s307
      %p318 = scmp.eq.s32.totalorder %s32, 0
      %p319 = por %p317, %p318
      %p320 = scmp.ne.s32.totalorder %s306, %s307
      %p321 = scmp.eq.s32.totalorder %s33, 1
      %p322 = por %p320, %p321
      %p324 = scmp.ne.s32.totalorder %s307, %s323
      %p325 = scmp.eq.s32.totalorder %s33, 0
      %p326 = por %p324, %p325
      %p327 = scmp.le.s32.totalorder 1, %s27
      %p328 = scmp.lt.s32.totalorder %s27, 3
      %p329 = pnand %p327, %p328
      %p330 = pneg %p329
      // Predicated region
      $region9: #{tpu_custom_call.1} parent=5 // pred_check
        _
      $region10: #{tpu_custom_call.1} parent=5 // pred_check_branch
        %332 = sbr.rel (%p329) target = $region12
      $region11: #{tpu_custom_call.1} parent=5 // pred_region
        %s333 = ssub.s32 %s27, 1
        // Predicated region
        $region13: #{tpu_custom_call.1} parent=11 // pred_check
          %p334 = pneg %p116
        $region14: #{tpu_custom_call.1} parent=11 // pred_check_branch
          %336 = sbr.rel (%p334) target = $region16
        $region15: #{tpu_custom_call.1} parent=11 // pred_region
          _
        $region16: #{tpu_custom_call.1} parent=11 // pred_fallthru
          _
        // Predicated region
        $region17: #{tpu_custom_call.1} parent=11 // pred_check
          %p337 = pneg %p137
        $region18: #{tpu_custom_call.1} parent=11 // pred_check_branch
          %339 = sbr.rel (%p337) target = $region20
        $region19: #{tpu_custom_call.1} parent=11 // pred_region
          _
        $region20: #{tpu_custom_call.1} parent=11 // pred_fallthru
          _
        // Predicated region
        $region21: #{tpu_custom_call.1} parent=11 // pred_check
          %p340 = pneg %p158
        $region22: #{tpu_custom_call.1} parent=11 // pred_check_branch
          %342 = sbr.rel (%p340) target = $region24
        $region23: #{tpu_custom_call.1} parent=11 // pred_region
          _
        $region24: #{tpu_custom_call.1} parent=11 // pred_fallthru
          _
        // Predicated region
        $region25: #{tpu_custom_call.1} parent=11 // pred_check
          %p343 = pneg %p179
        $region26: #{tpu_custom_call.1} parent=11 // pred_check_branch
          %345 = sbr.rel (%p343) target = $region28
        $region27: #{tpu_custom_call.1} parent=11 // pred_region
          _
        $region28: #{tpu_custom_call.1} parent=11 // pred_fallthru
          _
        // Predicated region
        $region29: #{tpu_custom_call.1} parent=11 // pred_check
          %p346 = pneg %p200
        $region30: #{tpu_custom_call.1} parent=11 // pred_check_branch
          %348 = sbr.rel (%p346) target = $region32
        $region31: #{tpu_custom_call.1} parent=11 // pred_region
          _
        $region32: #{tpu_custom_call.1} parent=11 // pred_fallthru
          _
        // Predicated region
        $region33: #{tpu_custom_call.1} parent=11 // pred_check
          %p349 = pneg %p221
        $region34: #{tpu_custom_call.1} parent=11 // pred_check_branch
          %351 = sbr.rel (%p349) target = $region36
        $region35: #{tpu_custom_call.1} parent=11 // pred_region
          _
        $region36: #{tpu_custom_call.1} parent=11 // pred_fallthru
          _
        // Predicated region
        $region37: #{tpu_custom_call.1} parent=11 // pred_check
          %p352 = pneg %p242
        $region38: #{tpu_custom_call.1} parent=11 // pred_check_branch
          %354 = sbr.rel (%p352) target = $region40
        $region39: #{tpu_custom_call.1} parent=11 // pred_region
          _
        $region40: #{tpu_custom_call.1} parent=11 // pred_fallthru
          _
        // Predicated region
        $region41: #{tpu_custom_call.1} parent=11 // pred_check
          %p355 = pneg %p263
        $region42: #{tpu_custom_call.1} parent=11 // pred_check_branch
          %357 = sbr.rel (%p355) target = $region44
        $region43: #{tpu_custom_call.1} parent=11 // pred_region
          _
        $region44: #{tpu_custom_call.1} parent=11 // pred_fallthru
          _
      $region12: #{tpu_custom_call.1} parent=5 // pred_fallthru
        _
      %p358 = scmp.lt.s32.totalorder %s27, 2
      // Predicated region
      $region45: #{tpu_custom_call.1} parent=5 // pred_check
        %p359 = pneg %p358
      $region46: #{tpu_custom_call.1} parent=5 // pred_check_branch
        %361 = sbr.rel (%p359) target = $region48
      $region47: #{tpu_custom_call.1} parent=5 // pred_region
        // Predicated region
        $region49: #{tpu_custom_call.1} parent=47 // pred_check
          %p362 = pneg %p61
        $region50: #{tpu_custom_call.1} parent=47 // pred_check_branch
          %364 = sbr.rel (%p362) target = $region52
        $region51: #{tpu_custom_call.1} parent=47 // pred_region
          %s365 = smul.u32 2, %s35
          %p366 = scmp.lt.s32.totalorder %s34, 1
          %s367 = scalar_select %p366, %s34, 1
          %p368 = scmp.lt.s32.totalorder %s365, 1
          %s369 = scalar_select %p368, %s365, 1
          %s370 = smul.addr %s367, 2
          %s371 = sadd.s32 %s369, %s370
          %s372 = smul.addr %s371, 4
          %s373 = scalar_lea.vmem %s0, %s372
          %s374 = smul.u32 2, %s35
        $region52: #{tpu_custom_call.1} parent=47 // pred_fallthru
          _
        // Predicated region
        $region53: #{tpu_custom_call.1} parent=47 // pred_check
          %p375 = pneg %p89
        $region54: #{tpu_custom_call.1} parent=47 // pred_check_branch
          %377 = sbr.rel (%p375) target = $region56
        $region55: #{tpu_custom_call.1} parent=47 // pred_region
          %s378 = sand.u32 %s79, 1
          %s379 = scalar_lea.sflag [#allocation3], %s378
          %s380 = sand.u32 %s79, 1
          %s381 = smul.addr %s380, 8
          %s382 = scalar_lea.vmem [#allocation2], %s381
          %s383 = smul.u32 2, %s35
          %s385 = ssub.s32 128, 128
          %386 = vsyncadd %s379, %s385
          %s387 = smul.addr %s34, 2
          %s388 = sadd.s32 %s383, %s387
          %s389 = smul.addr %s388, 64
          %s390 = scalar_lea.hbm %s1, %s389
          %s392 = sshll.u32 %s382, 4
          %s393 = int_to_ptr.vmem [resolvable:$true] %s392
          %395 = dma.hbm_to_vmem [thread:$0]  %s390, 128, %s393, %s379
        $region56: #{tpu_custom_call.1} parent=47 // pred_fallthru
          _
      $region48: #{tpu_custom_call.1} parent=5 // pred_fallthru
        _
      %p396 = scmp.le.s32.totalorder 1, %s27
      %p397 = scmp.lt.s32.totalorder %s27, 3
      %p398 = pnand %p396, %p397
      %p399 = pneg %p398
      // Predicated region
      $region57: #{tpu_custom_call.1} parent=5 // pred_check
        _
      $region58: #{tpu_custom_call.1} parent=5 // pred_check_branch
        %401 = sbr.rel (%p398) target = $region60
      $region59: #{tpu_custom_call.1} parent=5 // pred_region
        %s402 = ssub.s32 %s27, 1
        %s403 = sand.u32 %s82, 1
        %s404 = scalar_lea.sflag [#allocation3], %s403
        %s405 = sand.u32 %s82, 1
        %s406 = smul.addr %s405, 8
        %s407 = scalar_lea.vmem [#allocation2], %s406
        // Predicated region
        $region61: #{tpu_custom_call.1} parent=59 // pred_check
          %p408 = pneg %p95
        $region62: #{tpu_custom_call.1} parent=59 // pred_check_branch
          %410 = sbr.rel (%p408) target = $region64
        $region63: #{tpu_custom_call.1} parent=59 // pred_region
          %411 = dma.done %s404, 128
        $region64: #{tpu_custom_call.1} parent=59 // pred_fallthru
          _
        %s412 = smul.u32 2, %s37
        %p413 = scmp.lt.s32.totalorder %s36, 1
        %s414 = scalar_select %p413, %s36, 1
        %p415 = scmp.lt.s32.totalorder %s412, 1
        %s416 = scalar_select %p415, %s412, 1
        %s417 = smul.addr %s414, 2
        %s418 = sadd.s32 %s416, %s417
        %s419 = smul.addr %s418, 4
        %s420 = scalar_lea.vmem %s0, %s419
        %p421 = pneg %p67
        %p422 = pneg %p64
        %s423 = sand.u32 %s82, 1
        %s424 = scalar_lea.sflag [#allocation3], %s423
        %s425 = sand.u32 %s82, 1
        %s426 = smul.addr %s425, 8
        %s427 = scalar_lea.vmem [#allocation2], %s426
        %p428 = pneg %p95
        %p429 = pneg %p92
        %p430 = pneg %p116
        %p431 = pneg %p113
        %p432 = pneg %p137
        %p433 = pneg %p134
        %p434 = pneg %p158
        %p435 = pneg %p155
        %p436 = pneg %p179
        %p437 = pneg %p176
        %p438 = pneg %p200
        %p439 = pneg %p197
        %p440 = pneg %p221
        %p441 = pneg %p218
        %p442 = pneg %p242
        %p443 = pneg %p239
        %p444 = pneg %p263
        %p445 = pneg %p260
        %p446 = pneg %p291
        %p447 = pneg %p288
        %s448 = sand.u32 %s278, 1
        %s449 = scalar_lea.sflag [#allocation4], %s448
        %s450 = sand.u32 %s278, 1
        %s451 = smul.addr %s450, 8
        %s452 = scalar_lea.vmem [#allocation5], %s451
        %p453 = pneg %p319
        %p454 = pneg %p316
        %s455 = sand.u32 %s306, 1
        %s456 = scalar_lea.sflag [#allocation7], %s455
        %s457 = sand.u32 %s306, 1
        %s458 = smul.addr %s457, 8
        %s459 = scalar_lea.vmem [#allocation6], %s458
        %s460 = smul.u32 2, %s37
        %p461 = scmp.lt.s32.totalorder %s36, 1
        %s462 = scalar_select %p461, %s36, 1
        %p463 = scmp.lt.s32.totalorder %s460, 1
        %s464 = scalar_select %p463, %s460, 1
        %s465 = smul.addr %s462, 2
        %s466 = sadd.s32 %s464, %s465
        %s467 = smul.addr %s466, 4
        %s468 = scalar_lea.vmem %s0, %s467
        %s469 = smul.u32 2, %s37
        %s470 = smul.u32 2, %s37
        %s471 = smul.u32 2, %s37
        %s472 = smul.u32 2, %s37
        %v473 = vld [vmem:[%s468] sm:$0xff]
        %v474 = vld [vmem:[%s407] sm:$0xff]
        %v475 = vld [vmem:[%s2] sm:$0x3]
        %v476 = vld [vmem:[%s3] sm:$0x3]
        %v477 = vld [vmem:[%s4] sm:$0xf]
        %v478 = vld [vmem:[%s5] sm:$0xf]
        %480 = vset.pattern.permute.xlu0 0
        %481 = vperm.xlu0 %480, %v476
        %v482 = vpop.permute.xlu0 %481
        %v485 = vcombine.high %v473, %v473
        %vm486 = vcmask 31744
        %v488 = vsel %vm486, %v475, 0
        %vm490 = vcmask 1043456
        %v491 = vsel %vm490, %v473, 0
        %v493 = vsel %vm490, %v485, 0
        %495 = vmatprep.subr.mxu0 0.0
        %496 = vmatpush1.msra.mxu0 0.0
        %497 = vmatprep.subr.mxu0 0.0
        %498 = vmatpush1.msra.mxu0 0.0
        %499 = vmatprep.subr.mxu0 0.0
        %500 = vmatpush1.msra.mxu0 0.0
        %501 = vmatprep.subr.mxu0 0.0
        %502 = vmatpush1.msra.mxu0 0.0
        %503 = vmatprep.subr.mxu0 0.0
        %504 = vmatpush1.msra.mxu0 0.0
        %505 = vmatprep.subr.mxu0 0.0
        %506 = vmatpush1.msra.mxu0 0.0
        %507 = vmatprep.subr.mxu0 0.0
        %508 = vmatpush1.msra.mxu0 0.0
        %509 = vmatprep.subr.mxu0 0.0
        %510 = vmatpush1.msra.mxu0 0.0
        %511 = vmatprep.subr.mxu0 0.0
        %512 = vmatpush1.msra.mxu0 0.0
        %513 = vmatprep.subr.mxu0 0.0
        %514 = vmatpush1.msra.mxu0 0.0
        %515 = vmatprep.subr.mxu0 0.0
        %516 = vmatpush1.msra.mxu0 0.0
        %517 = vmatprep.subr.mxu0 0.0
        %518 = vmatpush1.msra.mxu0 0.0
        %519 = vmatprep.subr.mxu0 0.0
        %520 = vmatpush1.msra.mxu0 0.0
        %521 = vmatprep.subr.mxu0 0.0
        %522 = vmatpush1.msra.mxu0 0.0
        %523 = vmatprep.subr.mxu0 0.0
        %524 = vmatpush1.msra.mxu0 0.0
        %525 = vmatprep.subr.mxu0 %v493
        %526 = vmatpush1.msra.mxu0 %v491
        %527 = vmatprep.subr.mxu0 0.0
        %528 = vmatpush2.msra.mxu0 0.0
        %529 = vmatprep.subr.mxu0 0.0
        %530 = vmatpush2.msra.mxu0 0.0
        %531 = vmatprep.subr.mxu0 0.0
        %532 = vmatpush2.msra.mxu0 0.0
        %533 = vmatprep.subr.mxu0 0.0
        %534 = vmatpush2.msra.mxu0 0.0
        %535 = vmatprep.subr.mxu0 0.0
        %536 = vmatpush2.msra.mxu0 0.0
        %537 = vmatprep.subr.mxu0 0.0
        %538 = vmatpush2.msra.mxu0 0.0
        %539 = vmatprep.subr.mxu0 0.0
        %540 = vmatpush2.msra.mxu0 0.0
        %541 = vmatprep.subr.mxu0 0.0
        %542 = vmatpush2.msra.mxu0 0.0
        %543 = vmatprep.subr.mxu0 0.0
        %544 = vmatpush2.msra.mxu0 0.0
        %545 = vmatprep.subr.mxu0 0.0
        %546 = vmatpush2.msra.mxu0 0.0
        %547 = vmatprep.subr.mxu0 0.0
        %548 = vmatpush2.msra.mxu0 0.0
        %549 = vmatprep.subr.mxu0 0.0
        %550 = vmatpush2.msra.mxu0 0.0
        %551 = vmatprep.subr.mxu0 0.0
        %552 = vmatpush2.msra.mxu0 0.0
        %553 = vmatprep.subr.mxu0 0.0
        %554 = vmatpush2.msra.mxu0 0.0
        %555 = vmatprep.subr.mxu0 0.0
        %556 = vmatpush2.msra.mxu0 0.0
        %557 = vmatprep.subr.mxu0 0.0
        %558 = vmatpush2.msra.mxu0 0.0
        %559 = vmatprep.mubr.f32.mxu0 0.0
        %560 = vmatmul.mubr.f32.gmra.mxu0 %v488
        %v561 = vpop.f32.mrf.mxu0
        %v562 = vadd.f32 %v482, %v561
        %v563 = vpop.f32.mrf.mxu0
        %v564 = vadd.f32 %v482, %v563
        %565 = vdwg.mxu0
        %v566 = vmul.f32 %v562, 0.5
        %v567 = vmul.f32 %v564, 0.5
        %v568 = vrcp.pop 1.4142135
        %v569 = vmul.f32 %v562, %v568
        %v570 = vmul.f32 %v564, %v568
        %v571 = verf.f32.pop %v569
        %v572 = verf.f32.pop %v570
        %v573 = vadd.f32 %v571, 1.0
        %v574 = vadd.f32 %v572, 1.0
        %v575 = vmul.f32 %v566, %v573
        %v576 = vmul.f32 %v567, %v574
        %578 = vset.pattern.permute.xlu0 0
        %579 = vperm.xlu0 %578, %v478
        %v580 = vpop.permute.xlu0 %579
        %vm582 = vcmask 15360
        %v584 = vsel %vm582, %v477, 0
        %vm586 = vcmask 1041408
        %v588 = vsel %vm586, %v575, 0
        %v591 = vsel %vm586, %v576, 0
        %593 = vmatprep.subr.mxu0 0.0
        %594 = vmatpush1.msra.mxu0 0.0
        %595 = vmatprep.subr.mxu0 0.0
        %596 = vmatpush1.msra.mxu0 0.0
        %597 = vmatprep.subr.mxu0 0.0
        %598 = vmatpush1.msra.mxu0 0.0
        %599 = vmatprep.subr.mxu0 0.0
        %600 = vmatpush1.msra.mxu0 0.0
        %601 = vmatprep.subr.mxu0 0.0
        %602 = vmatpush1.msra.mxu0 0.0
        %603 = vmatprep.subr.mxu0 0.0
        %604 = vmatpush1.msra.mxu0 0.0
        %605 = vmatprep.subr.mxu0 0.0
        %606 = vmatpush1.msra.mxu0 0.0
        %607 = vmatprep.subr.mxu0 0.0
        %608 = vmatpush1.msra.mxu0 0.0
        %609 = vmatprep.subr.mxu0 0.0
        %610 = vmatpush1.msra.mxu0 0.0
        %611 = vmatprep.subr.mxu0 0.0
        %612 = vmatpush1.msra.mxu0 0.0
        %613 = vmatprep.subr.mxu0 0.0
        %614 = vmatpush1.msra.mxu0 0.0
        %615 = vmatprep.subr.mxu0 0.0
        %616 = vmatpush1.msra.mxu0 0.0
        %617 = vmatprep.subr.mxu0 0.0
        %618 = vmatpush1.msra.mxu0 0.0
        %619 = vmatprep.subr.mxu0 0.0
        %620 = vmatpush1.msra.mxu0 0.0
        %621 = vmatprep.subr.mxu0 0.0
        %622 = vmatpush1.msra.mxu0 0.0
        %623 = vmatprep.subr.mxu0 %v591
        %624 = vmatpush1.msra.mxu0 %v588
        %625 = vmatprep.subr.mxu0 0.0
        %626 = vmatpush2.msra.mxu0 0.0
        %627 = vmatprep.subr.mxu0 0.0
        %628 = vmatpush2.msra.mxu0 0.0
        %629 = vmatprep.subr.mxu0 0.0
        %630 = vmatpush2.msra.mxu0 0.0
        %631 = vmatprep.subr.mxu0 0.0
        %632 = vmatpush2.msra.mxu0 0.0
        %633 = vmatprep.subr.mxu0 0.0
        %634 = vmatpush2.msra.mxu0 0.0
        %635 = vmatprep.subr.mxu0 0.0
        %636 = vmatpush2.msra.mxu0 0.0
        %637 = vmatprep.subr.mxu0 0.0
        %638 = vmatpush2.msra.mxu0 0.0
        %639 = vmatprep.subr.mxu0 0.0
        %640 = vmatpush2.msra.mxu0 0.0
        %641 = vmatprep.subr.mxu0 0.0
        %642 = vmatpush2.msra.mxu0 0.0
        %643 = vmatprep.subr.mxu0 0.0
        %644 = vmatpush2.msra.mxu0 0.0
        %645 = vmatprep.subr.mxu0 0.0
        %646 = vmatpush2.msra.mxu0 0.0
        %647 = vmatprep.subr.mxu0 0.0
        %648 = vmatpush2.msra.mxu0 0.0
        %649 = vmatprep.subr.mxu0 0.0
        %650 = vmatpush2.msra.mxu0 0.0
        %651 = vmatprep.subr.mxu0 0.0
        %652 = vmatpush2.msra.mxu0 0.0
        %653 = vmatprep.subr.mxu0 0.0
        %654 = vmatpush2.msra.mxu0 0.0
        %655 = vmatprep.subr.mxu0 0.0
        %656 = vmatpush2.msra.mxu0 0.0
        %657 = vmatprep.mubr.f32.mxu0 0.0
        %658 = vmatmul.mubr.f32.gmra.mxu0 %v584
        %v659 = vpop.f32.mrf.mxu0
        %v660 = vadd.f32 %v580, %v659
        %v661 = vpop.f32.mrf.mxu0
        %v662 = vadd.f32 %v580, %v661
        %663 = vdwg.mxu0
        %v664 = vld [vmem:[%s6] sm:$0x3]
        %v665 = vld [vmem:[%s7] sm:$0x3]
        %v666 = vld [vmem:[%s8] sm:$0xf]
        %v667 = vld [vmem:[%s9] sm:$0xf]
        %669 = vset.pattern.permute.xlu0 0
        %670 = vperm.xlu0 %669, %v665
        %v671 = vpop.permute.xlu0 %670
        %v674 = vcombine.high %v474, %v474
        %v676 = vsel %vm486, %v664, 0
        %v678 = vsel %vm490, %v474, 0
        %v680 = vsel %vm490, %v674, 0
        %682 = vmatprep.subr.mxu0 0.0
        %683 = vmatpush1.msra.mxu0 0.0
        %684 = vmatprep.subr.mxu0 0.0
        %685 = vmatpush1.msra.mxu0 0.0
        %686 = vmatprep.subr.mxu0 0.0
        %687 = vmatpush1.msra.mxu0 0.0
        %688 = vmatprep.subr.mxu0 0.0
        %689 = vmatpush1.msra.mxu0 0.0
        %690 = vmatprep.subr.mxu0 0.0
        %691 = vmatpush1.msra.mxu0 0.0
        %692 = vmatprep.subr.mxu0 0.0
        %693 = vmatpush1.msra.mxu0 0.0
        %694 = vmatprep.subr.mxu0 0.0
        %695 = vmatpush1.msra.mxu0 0.0
        %696 = vmatprep.subr.mxu0 0.0
        %697 = vmatpush1.msra.mxu0 0.0
        %698 = vmatprep.subr.mxu0 0.0
        %699 = vmatpush1.msra.mxu0 0.0
        %700 = vmatprep.subr.mxu0 0.0
        %701 = vmatpush1.msra.mxu0 0.0
        %702 = vmatprep.subr.mxu0 0.0
        %703 = vmatpush1.msra.mxu0 0.0
        %704 = vmatprep.subr.mxu0 0.0
        %705 = vmatpush1.msra.mxu0 0.0
        %706 = vmatprep.subr.mxu0 0.0
        %707 = vmatpush1.msra.mxu0 0.0
        %708 = vmatprep.subr.mxu0 0.0
        %709 = vmatpush1.msra.mxu0 0.0
        %710 = vmatprep.subr.mxu0 0.0
        %711 = vmatpush1.msra.mxu0 0.0
        %712 = vmatprep.subr.mxu0 %v680
        %713 = vmatpush1.msra.mxu0 %v678
        %714 = vmatprep.subr.mxu0 0.0
        %715 = vmatpush2.msra.mxu0 0.0
        %716 = vmatprep.subr.mxu0 0.0
        %717 = vmatpush2.msra.mxu0 0.0
        %718 = vmatprep.subr.mxu0 0.0
        %719 = vmatpush2.msra.mxu0 0.0
        %720 = vmatprep.subr.mxu0 0.0
        %721 = vmatpush2.msra.mxu0 0.0
        %722 = vmatprep.subr.mxu0 0.0
        %723 = vmatpush2.msra.mxu0 0.0
        %724 = vmatprep.subr.mxu0 0.0
        %725 = vmatpush2.msra.mxu0 0.0
        %726 = vmatprep.subr.mxu0 0.0
        %727 = vmatpush2.msra.mxu0 0.0
        %728 = vmatprep.subr.mxu0 0.0
        %729 = vmatpush2.msra.mxu0 0.0
        %730 = vmatprep.subr.mxu0 0.0
        %731 = vmatpush2.msra.mxu0 0.0
        %732 = vmatprep.subr.mxu0 0.0
        %733 = vmatpush2.msra.mxu0 0.0
        %734 = vmatprep.subr.mxu0 0.0
        %735 = vmatpush2.msra.mxu0 0.0
        %736 = vmatprep.subr.mxu0 0.0
        %737 = vmatpush2.msra.mxu0 0.0
        %738 = vmatprep.subr.mxu0 0.0
        %739 = vmatpush2.msra.mxu0 0.0
        %740 = vmatprep.subr.mxu0 0.0
        %741 = vmatpush2.msra.mxu0 0.0
        %742 = vmatprep.subr.mxu0 0.0
        %743 = vmatpush2.msra.mxu0 0.0
        %744 = vmatprep.subr.mxu0 0.0
        %745 = vmatpush2.msra.mxu0 0.0
        %746 = vmatprep.mubr.f32.mxu0 0.0
        %747 = vmatmul.mubr.f32.gmra.mxu0 %v676
        %v748 = vpop.f32.mrf.mxu0
        %v749 = vadd.f32 %v671, %v748
        %v750 = vpop.f32.mrf.mxu0
        %v751 = vadd.f32 %v671, %v750
        %752 = vdwg.mxu0
        %v753 = vmul.f32 %v749, 0.5
        %v754 = vmul.f32 %v751, 0.5
        %v755 = vmul.f32 %v749, %v568
        %v756 = vmul.f32 %v751, %v568
        %v757 = verf.f32.pop %v755
        %v758 = verf.f32.pop %v756
        %v759 = vadd.f32 %v757, 1.0
        %v760 = vadd.f32 %v758, 1.0
        %v761 = vmul.f32 %v753, %v759
        %v762 = vmul.f32 %v754, %v760
        %764 = vset.pattern.permute.xlu0 0
        %765 = vperm.xlu0 %764, %v667
        %v766 = vpop.permute.xlu0 %765
        %v769 = vsel %vm582, %v666, 0
        %v772 = vsel %vm586, %v761, 0
        %v775 = vsel %vm586, %v762, 0
        %777 = vmatprep.subr.mxu0 0.0
        %778 = vmatpush1.msra.mxu0 0.0
        %779 = vmatprep.subr.mxu0 0.0
        %780 = vmatpush1.msra.mxu0 0.0
        %781 = vmatprep.subr.mxu0 0.0
        %782 = vmatpush1.msra.mxu0 0.0
        %783 = vmatprep.subr.mxu0 0.0
        %784 = vmatpush1.msra.mxu0 0.0
        %785 = vmatprep.subr.mxu0 0.0
        %786 = vmatpush1.msra.mxu0 0.0
        %787 = vmatprep.subr.mxu0 0.0
        %788 = vmatpush1.msra.mxu0 0.0
        %789 = vmatprep.subr.mxu0 0.0
        %790 = vmatpush1.msra.mxu0 0.0
        %791 = vmatprep.subr.mxu0 0.0
        %792 = vmatpush1.msra.mxu0 0.0
        %793 = vmatprep.subr.mxu0 0.0
        %794 = vmatpush1.msra.mxu0 0.0
        %795 = vmatprep.subr.mxu0 0.0
        %796 = vmatpush1.msra.mxu0 0.0
        %797 = vmatprep.subr.mxu0 0.0
        %798 = vmatpush1.msra.mxu0 0.0
        %799 = vmatprep.subr.mxu0 0.0
        %800 = vmatpush1.msra.mxu0 0.0
        %801 = vmatprep.subr.mxu0 0.0
        %802 = vmatpush1.msra.mxu0 0.0
        %803 = vmatprep.subr.mxu0 0.0
        %804 = vmatpush1.msra.mxu0 0.0
        %805 = vmatprep.subr.mxu0 0.0
        %806 = vmatpush1.msra.mxu0 0.0
        %807 = vmatprep.subr.mxu0 %v775
        %808 = vmatpush1.msra.mxu0 %v772
        %809 = vmatprep.subr.mxu0 0.0
        %810 = vmatpush2.msra.mxu0 0.0
        %811 = vmatprep.subr.mxu0 0.0
        %812 = vmatpush2.msra.mxu0 0.0
        %813 = vmatprep.subr.mxu0 0.0
        %814 = vmatpush2.msra.mxu0 0.0
        %815 = vmatprep.subr.mxu0 0.0
        %816 = vmatpush2.msra.mxu0 0.0
        %817 = vmatprep.subr.mxu0 0.0
        %818 = vmatpush2.msra.mxu0 0.0
        %819 = vmatprep.subr.mxu0 0.0
        %820 = vmatpush2.msra.mxu0 0.0
        %821 = vmatprep.subr.mxu0 0.0
        %822 = vmatpush2.msra.mxu0 0.0
        %823 = vmatprep.subr.mxu0 0.0
        %824 = vmatpush2.msra.mxu0 0.0
        %825 = vmatprep.subr.mxu0 0.0
        %826 = vmatpush2.msra.mxu0 0.0
        %827 = vmatprep.subr.mxu0 0.0
        %828 = vmatpush2.msra.mxu0 0.0
        %829 = vmatprep.subr.mxu0 0.0
        %830 = vmatpush2.msra.mxu0 0.0
        %831 = vmatprep.subr.mxu0 0.0
        %832 = vmatpush2.msra.mxu0 0.0
        %833 = vmatprep.subr.mxu0 0.0
        %834 = vmatpush2.msra.mxu0 0.0
        %835 = vmatprep.subr.mxu0 0.0
        %836 = vmatpush2.msra.mxu0 0.0
        %837 = vmatprep.subr.mxu0 0.0
        %838 = vmatpush2.msra.mxu0 0.0
        %839 = vmatprep.subr.mxu0 0.0
        %840 = vmatpush2.msra.mxu0 0.0
        %841 = vmatprep.mubr.f32.mxu0 0.0
        %842 = vmatmul.mubr.f32.gmra.mxu0 %v769
        %v843 = vpop.f32.mrf.mxu0
        %v844 = vadd.f32 %v766, %v843
        %v845 = vpop.f32.mrf.mxu0
        %v846 = vadd.f32 %v766, %v845
        %847 = vdwg.mxu0
        %v848 = vmul.f32 %v844, 0.15915494
        %v849 = vmul.f32 %v846, 0.15915494
        %v850 = vadd.f32 %v848, 0.5
        %v851 = vadd.f32 %v849, 0.5
        %v852 = vfloor.f32 %v850
        %v853 = vfloor.f32 %v851
        %v854 = vmul.f32 %v852, 6.2831855
        %v855 = vmul.f32 %v853, 6.2831855
        %v856 = vsub.f32 %v844, %v854
        %v857 = vsub.f32 %v846, %v855
        %vm858 = vcmp.gt.f32.partialorder %v856, 1.5707964
        %vm859 = vcmp.gt.f32.partialorder %v857, 1.5707964
        %v860 = vsub.f32 3.1415927, %v856
        %v861 = vsub.f32 3.1415927, %v857
        %v862 = vsel %vm858, %v860, %v856
        %v863 = vsel %vm859, %v861, %v857
        %vm864 = vcmp.lt.f32.partialorder %v862, -1.5707964
        %vm865 = vcmp.lt.f32.partialorder %v863, -1.5707964
        %v866 = vsub.f32 -3.1415927, %v862
        %v867 = vsub.f32 -3.1415927, %v863
        %v868 = vsel %vm864, %v866, %v862
        %v869 = vsel %vm865, %v867, %v863
        %v870 = vand.u32 2147483647, %v856
        %v871 = vand.u32 2147483647, %v857
        %v872 = vsub.f32 1.5707964, %v870
        %v873 = vsub.f32 1.5707964, %v871
        %v874 = vmul.f32 %v868, %v868
        %v875 = vmul.f32 %v869, %v869
        %v876 = vmul.f32 %v874, -2.5052108e-08
        %v877 = vmul.f32 %v875, -2.5052108e-08
        %v878 = vadd.f32 %v876, 2.7557319e-06
        %v879 = vadd.f32 %v877, 2.7557319e-06
        %v880 = vmul.f32 %v878, %v874
        %v881 = vmul.f32 %v879, %v875
        %v882 = vsub.f32 %v880, 0.0001984127
        %v883 = vsub.f32 %v881, 0.0001984127
        %v884 = vmul.f32 %v882, %v874
        %v885 = vmul.f32 %v883, %v875
        %v886 = vadd.f32 %v884, 0.008333334
        %v887 = vadd.f32 %v885, 0.008333334
        %v888 = vmul.f32 %v886, %v874
        %v889 = vmul.f32 %v887, %v875
        %v890 = vsub.f32 %v888, 0.16666667
        %v891 = vsub.f32 %v889, 0.16666667
        %v892 = vmul.f32 %v890, %v874
        %v893 = vmul.f32 %v891, %v875
        %v894 = vadd.f32 %v892, 1.0
        %v895 = vadd.f32 %v893, 1.0
        %v896 = vmul.f32 %v868, %v894
        %v897 = vmul.f32 %v869, %v895
        %v898 = vmul.f32 %v872, %v872
        %v899 = vmul.f32 %v873, %v873
        %v900 = vmul.f32 %v898, -2.5052108e-08
        %v901 = vmul.f32 %v899, -2.5052108e-08
        %v902 = vadd.f32 %v900, 2.7557319e-06
        %v903 = vadd.f32 %v901, 2.7557319e-06
        %v904 = vmul.f32 %v902, %v898
        %v905 = vmul.f32 %v903, %v899
        %v906 = vsub.f32 %v904, 0.0001984127
        %v907 = vsub.f32 %v905, 0.0001984127
        %v908 = vmul.f32 %v906, %v898
        %v909 = vmul.f32 %v907, %v899
        %v910 = vadd.f32 %v908, 0.008333334
        %v911 = vadd.f32 %v909, 0.008333334
        %v912 = vmul.f32 %v910, %v898
        %v913 = vmul.f32 %v911, %v899
        %v914 = vsub.f32 %v912, 0.16666667
        %v915 = vsub.f32 %v913, 0.16666667
        %v916 = vmul.f32 %v914, %v898
        %v917 = vmul.f32 %v915, %v899
        %v918 = vadd.f32 %v916, 1.0
        %v919 = vadd.f32 %v917, 1.0
        %v920 = vmul.f32 %v872, %v918
        %v921 = vmul.f32 %v873, %v919
        %v922 = vmul.f32 %v660, %v920
        %v923 = vmul.f32 %v662, %v921
        %v926 = vcombine.low %v922, %v923
        %928 = vst [vmem:[%s452] sm:$0xff] %v926
        %v929 = vmul.f32 %v660, %v896
        %v930 = vmul.f32 %v662, %v897
        %v933 = vcombine.low %v929, %v930
        %935 = vst [vmem:[%s459] sm:$0xff] %v933
        %s936 = sand.u32 %s278, 1
        %s937 = scalar_lea.sflag [#allocation4], %s936
        %s938 = sand.u32 %s278, 1
        %s939 = smul.addr %s938, 8
        %s940 = scalar_lea.vmem [#allocation5], %s939
        %s941 = sand.u32 %s306, 1
        %s942 = scalar_lea.sflag [#allocation7], %s941
        %s943 = sand.u32 %s306, 1
        %s944 = smul.addr %s943, 8
        %s945 = scalar_lea.vmem [#allocation6], %s944
        // Predicated region
        $region65: #{tpu_custom_call.1} parent=59 // pred_check
          %p946 = pneg %p288
        $region66: #{tpu_custom_call.1} parent=59 // pred_check_branch
          %948 = sbr.rel (%p946) target = $region68
        $region67: #{tpu_custom_call.1} parent=59 // pred_region
          %s949 = smul.u32 2, %s37
          %s951 = ssub.s32 128, 128
          %952 = vsyncadd %s937, %s951
          %s953 = smul.addr %s36, 2
          %s954 = sadd.s32 %s949, %s953
          %s955 = smul.addr %s954, 64
          %s956 = scalar_lea.hbm %s10, %s955
          %s958 = sshll.u32 %s940, 4
          %s959 = int_to_ptr.vmem [resolvable:$true] %s958
          %961 = dma.vmem_to_hbm [thread:$0]  %s959, 128, %s956, %s937
        $region68: #{tpu_custom_call.1} parent=59 // pred_fallthru
          _
        // Predicated region
        $region69: #{tpu_custom_call.1} parent=59 // pred_check
          %p962 = pneg %p316
        $region70: #{tpu_custom_call.1} parent=59 // pred_check_branch
          %964 = sbr.rel (%p962) target = $region72
        $region71: #{tpu_custom_call.1} parent=59 // pred_region
          %s965 = smul.u32 2, %s37
          %s967 = ssub.s32 128, 128
          %968 = vsyncadd %s942, %s967
          %s969 = smul.addr %s36, 2
          %s970 = sadd.s32 %s965, %s969
          %s971 = smul.addr %s970, 64
          %s972 = scalar_lea.hbm %s11, %s971
          %s974 = sshll.u32 %s945, 4
          %s975 = int_to_ptr.vmem [resolvable:$true] %s974
          %977 = dma.vmem_to_hbm [thread:$0]  %s975, 128, %s972, %s942
        $region72: #{tpu_custom_call.1} parent=59 // pred_fallthru
          _
      $region60: #{tpu_custom_call.1} parent=5 // pred_fallthru
        _
      %p978 = scmp.le.s32.totalorder 2, %s27
      // Predicated region
      $region73: #{tpu_custom_call.1} parent=5 // pred_check
        %p979 = pneg %p978
      $region74: #{tpu_custom_call.1} parent=5 // pred_check_branch
        %981 = sbr.rel (%p979) target = $region76
      $region75: #{tpu_custom_call.1} parent=5 // pred_region
        %s982 = ssub.s32 %s27, 2
        // Predicated region
        $region77: #{tpu_custom_call.1} parent=75 // pred_check
          %p983 = pneg %p294
        $region78: #{tpu_custom_call.1} parent=75 // pred_check_branch
          %985 = sbr.rel (%p983) target = $region80
        $region79: #{tpu_custom_call.1} parent=75 // pred_region
          %s986 = sand.u32 %s279, 1
          %s987 = scalar_lea.sflag [#allocation4], %s986
          %s988 = sand.u32 %s279, 1
          %s989 = smul.addr %s988, 8
          %s990 = scalar_lea.vmem [#allocation5], %s989
          %991 = dma.done %s987, 128
        $region80: #{tpu_custom_call.1} parent=75 // pred_fallthru
          _
        // Predicated region
        $region81: #{tpu_custom_call.1} parent=75 // pred_check
          %p992 = pneg %p322
        $region82: #{tpu_custom_call.1} parent=75 // pred_check_branch
          %994 = sbr.rel (%p992) target = $region84
        $region83: #{tpu_custom_call.1} parent=75 // pred_region
          %s995 = sand.u32 %s307, 1
          %s996 = scalar_lea.sflag [#allocation7], %s995
          %s997 = sand.u32 %s307, 1
          %s998 = smul.addr %s997, 8
          %s999 = scalar_lea.vmem [#allocation6], %s998
          %1000 = dma.done %s996, 128
        $region84: #{tpu_custom_call.1} parent=75 // pred_fallthru
          _
      $region76: #{tpu_custom_call.1} parent=5 // pred_fallthru
        _
    $region6: #{tpu_custom_call.1} parent=1 // loop_footer
      %s31 = sadd.s32 1, %s27
    $region7: #{tpu_custom_call.1} parent=1 // loop_footer_branch
      %26 = sbr.rel target = $region3
    $region8: #{tpu_custom_call.1} parent=1 // loop_exit
      _
    %1001 = vsyncpa [#allocation3], 1
    %s1002 = scalar_lea.sflag [#allocation3], 1
    %1003 = vsyncpa %s1002, 1
    %1004 = vsyncpa [#allocation4], 1
    %s1005 = scalar_lea.sflag [#allocation4], 1
    %1006 = vsyncpa %s1005, 1
    %1007 = vsyncpa [#allocation7], 1
    %s1008 = scalar_lea.sflag [#allocation7], 1
    %1009 = vsyncpa %s1008, 1

</llo_original>
